<compile_context>
chip_gen: v7x
topology: tpu7x:2x2x1
jax: 0.10.0
libtpu: 0.0.40
codegen_flags: <defaults>
</compile_context>

<pallas_src>
import functools

import jax
import jax.numpy as jnp
from jax.experimental import pallas as pl
from jax.experimental.pallas import tpu as pltpu

LRELU_SLOPE = 0.2
BN_EPS = 1e-5
KW = 4                       # conv kernel size
PADW = 2                     # int(ceil((4 - 1) / 2))
NCORES = 2                   # stat-split width for the conv+stats pass


def _round_up(x, m):
    return ((x + m - 1) // m) * m


def _cpad(c):
    return _round_up(max(int(c), 1), 128)


_VMEM_PLAN_CACHE = None


def _vmem_plan():
    """Return (per-kernel VMEM budget, vmem_limit_bytes), generation aware."""
    global _VMEM_PLAN_CACHE
    if _VMEM_PLAN_CACHE is None:
        try:
            cap = int(pltpu.get_tpu_info().vmem_capacity_bytes)
        except Exception:
            cap = 64 * 1024 * 1024                      # conservative fallback
        if cap >= 96 * 1024 * 1024:                     # v5e / v6e (128 MiB)
            _VMEM_PLAN_CACHE = (64 * 1024 * 1024, 100 * 1024 * 1024)
        else:                                           # v7x (64 MiB)
            _VMEM_PLAN_CACHE = (26 * 1024 * 1024, 48 * 1024 * 1024)
    return _VMEM_PLAN_CACHE


def _plan_m(m, k, cout_pad, ncores):
    """Pick row-tile TM, tile count and padded M under an explicit VMEM budget."""
    budget, _ = _vmem_plan()
    # Resident: bf16 weight block (double-buffered by BlockSpec) + small vectors.
    fixed = 2 * k * cout_pad * 2 + 16 * cout_pad * 4
    # Per output row: double-buffered bf16 patch row + double-buffered f32 out row.
    per_row = 2 * (k * 2) + 2 * (cout_pad * 4)
    tm_cap = (budget - fixed) // per_row
    tm_cap = max(16, min(2048, (tm_cap // 16) * 16))
    tiles = -(-m // tm_cap)                     # cdiv
    tiles = _round_up(tiles, ncores)
    tm = _round_up(-(-m // tiles), 16)          # rebalance: bounded padding waste
    m_pad = tiles * tm
    return tm, tiles, m_pad


# ----------------------------- Pallas kernels -------------------------------
def _conv_act_kernel(p_ref, w_ref, b_ref, o_ref, *, use_act):
    """One M-tile: im2col matmul (bf16 -> f32 acc) + bias + optional LeakyReLU."""
    acc = jnp.dot(p_ref[...], w_ref[...], preferred_element_type=jnp.float32)
    acc = acc + b_ref[...]
    if use_act:
        acc = jnp.where(acc > 0, acc, LRELU_SLOPE * acc)
    o_ref[...] = acc.astype(o_ref.dtype)


def _conv_stats_kernel(p_ref, w_ref, b_ref, o_ref, sum_ref, ssq_ref,
                       *, tm, tiles_per_core, m_actual):
    """One M-tile: matmul + bias; accumulate masked per-core channel sums."""
    c = pl.program_id(0)
    i = pl.program_id(1)
    acc = jnp.dot(p_ref[...], w_ref[...], preferred_element_type=jnp.float32)
    acc = acc + b_ref[...]
    o_ref[...] = acc.astype(o_ref.dtype)

    @pl.when(i == 0)
    def _():
        sum_ref[...] = jnp.zeros_like(sum_ref)
        ssq_ref[...] = jnp.zeros_like(ssq_ref)

    # Mask padded rows so they don't pollute the BatchNorm batch statistics.
    row = (c * tiles_per_core + i) * tm + jax.lax.broadcasted_iota(
        jnp.int32, acc.shape, 0)
    valid = (row < m_actual).astype(jnp.float32)
    a = acc * valid
    sum_ref[...] += jnp.sum(a, axis=0, keepdims=True)
    ssq_ref[...] += jnp.sum(a * a, axis=0, keepdims=True)


def _bn_act_kernel(x_ref, sum_ref, ssq_ref, g_ref, be_ref, o_ref,
                   *, m_actual, use_act):
    """One M-tile: BatchNorm (batch stats, biased var) + affine + LeakyReLU."""
    s = jnp.sum(sum_ref[...], axis=0, keepdims=True)      # reduce per-core partials
    ss = jnp.sum(ssq_ref[...], axis=0, keepdims=True)
    inv_m = jnp.float32(1.0 / m_actual)
    mean = s * inv_m
    # TODO(synk): E[x^2]-E[x]^2 in f32 can cancel for large |mean|/std; a
    # shifted / two-pass formulation would be safer.
    var = jnp.maximum(ss * inv_m - mean * mean, 0.0)
    scale = jax.lax.rsqrt(var + BN_EPS) * g_ref[...]
    shift = be_ref[...] - mean * scale
    y = x_ref[...] * scale + shift
    if use_act:
        y = jnp.where(y > 0, y, LRELU_SLOPE * y)
    o_ref[...] = y.astype(o_ref.dtype)


# ------------------------------- JAX glue -----------------------------------
def _conv_geometry(h, w, kh, kw, stride, pad):
    oh = (h + 2 * pad - kh) // stride + 1
    ow = (w + 2 * pad - kw) // stride + 1
    return oh, ow


def _extract_patches(x_nhwc, kh, kw, stride, pad, m_pad):
    """im2col on bf16 input: (N,H,W,C) -> (m_pad, kh*kw*C), order (kh, kw, c)."""
    x = jnp.pad(x_nhwc, ((0, 0), (pad, pad), (pad, pad), (0, 0)))
    N, H, W, C = x.shape
    OH = (H - kh) // stride + 1
    OW = (W - kw) // stride + 1
    cols = []
    for i in range(kh):
        for j in range(kw):
            cols.append(x[:, i:i + (OH - 1) * stride + 1:stride,
                          j:j + (OW - 1) * stride + 1:stride, :])
    p = jnp.stack(cols, axis=3)                     # (N, OH, OW, kh*kw, C)
    p = p.reshape(N * OH * OW, kh * kw * C)
    M = N * OH * OW
    if m_pad > M:
        p = jnp.pad(p, ((0, m_pad - M), (0, 0)))
    return p, (N, OH, OW)


def _pack_weight(w_oihw, cout_pad):
    """OIHW -> (KH*KW*Cin, Cout_pad), only Cout zero-padded, matching patch order."""
    cout, cin, kh, kw = w_oihw.shape
    w_t = jnp.transpose(w_oihw, (2, 3, 1, 0))       # (KH, KW, Cin, Cout)
    w_t = w_t.reshape(kh * kw * cin, cout)
    return jnp.pad(w_t, ((0, 0), (0, cout_pad - cout)))


def disc_layer(x_nhwc, w, b, gamma, beta, *, stride, use_bn, use_act):
    """One discriminator block on a (channel-trimmed) bf16 NHWC activation.

    Returns (next_activation_nhwc, feature_map_nchw_f32)."""
    cout = int(w.shape[0])
    cin = int(x_nhwc.shape[-1])
    cout_pad = _cpad(cout)
    out_dtype = jnp.bfloat16 if (use_bn or use_act) else jnp.float32
    _, vmem_limit = _vmem_plan()

    N, H, W = int(x_nhwc.shape[0]), int(x_nhwc.shape[1]), int(x_nhwc.shape[2])
    OH, OW = _conv_geometry(H, W, KW, KW, stride, PADW)
    M = N * OH * OW
    K = KW * KW * cin

    ncores = NCORES if use_bn else 1
    tm, tiles, m_pad = _plan_m(M, K, cout_pad, ncores)

    patches, _ = _extract_patches(x_nhwc.astype(jnp.bfloat16), KW, KW,
                                  stride, PADW, m_pad)
    w_mat = _pack_weight(w, cout_pad).astype(jnp.bfloat16)
    b_pad = jnp.pad(b, (0, cout_pad - cout)).reshape(1, cout_pad).astype(jnp.float32)
    g_pad = jnp.pad(gamma, (0, cout_pad - cout)).reshape(1, cout_pad).astype(jnp.float32)
    be_pad = jnp.pad(beta, (0, cout_pad - cout)).reshape(1, cout_pad).astype(jnp.float32)

    if not use_bn:
        out = pl.pallas_call(
            functools.partial(_conv_act_kernel, use_act=use_act),
            out_shape=jax.ShapeDtypeStruct((m_pad, cout_pad), out_dtype),
            grid=(tiles,),
            in_specs=[pl.BlockSpec((tm, K), lambda i: (i, 0)),
                      pl.BlockSpec((K, cout_pad), lambda i: (0, 0)),
                      pl.BlockSpec((1, cout_pad), lambda i: (0, 0))],
            out_specs=pl.BlockSpec((tm, cout_pad), lambda i: (i, 0)),
            compiler_params=pltpu.CompilerParams(
                dimension_semantics=("parallel",),
                vmem_limit_bytes=vmem_limit),
        )(patches, w_mat, b_pad)
    else:
        half = tiles // NCORES
        # Pass A: conv + bias, per-core partial sum / sum-of-squares rows.
        # Leading "parallel" axis keeps both TensorCores busy on v7x.
        conv_out, s, ss = pl.pallas_call(
            functools.partial(_conv_stats_kernel, tm=tm,
                              tiles_per_core=half, m_actual=M),
            out_shape=(jax.ShapeDtypeStruct((m_pad, cout_pad), jnp.float32),
                       jax.ShapeDtypeStruct((NCORES, cout_pad), jnp.float32),
                       jax.ShapeDtypeStruct((NCORES, cout_pad), jnp.float32)),
            grid=(NCORES, half),
            in_specs=[pl.BlockSpec((tm, K), lambda c, i: (c * half + i, 0)),
                      pl.BlockSpec((K, cout_pad), lambda c, i: (0, 0)),
                      pl.BlockSpec((1, cout_pad), lambda c, i: (0, 0))],
            out_specs=(pl.BlockSpec((tm, cout_pad), lambda c, i: (c * half + i, 0)),
                       pl.BlockSpec((1, cout_pad), lambda c, i: (c, 0)),
                       pl.BlockSpec((1, cout_pad), lambda c, i: (c, 0))),
            compiler_params=pltpu.CompilerParams(
                dimension_semantics=("parallel", "arbitrary"),
                vmem_limit_bytes=vmem_limit),
        )(patches, w_mat, b_pad)

        # Pass B: normalize with finalized stats + gamma/beta + LeakyReLU.
        out = pl.pallas_call(
            functools.partial(_bn_act_kernel, m_actual=M, use_act=use_act),
            out_shape=jax.ShapeDtypeStruct((m_pad, cout_pad), out_dtype),
            grid=(tiles,),
            in_specs=[pl.BlockSpec((tm, cout_pad), lambda i: (i, 0)),
                      pl.BlockSpec((NCORES, cout_pad), lambda i: (0, 0)),
                      pl.BlockSpec((NCORES, cout_pad), lambda i: (0, 0)),
                      pl.BlockSpec((1, cout_pad), lambda i: (0, 0)),
                      pl.BlockSpec((1, cout_pad), lambda i: (0, 0))],
            out_specs=pl.BlockSpec((tm, cout_pad), lambda i: (i, 0)),
            compiler_params=pltpu.CompilerParams(
                dimension_semantics=("parallel",),
                vmem_limit_bytes=vmem_limit),
        )(conv_out, s, ss, g_pad, be_pad)

    out_trim = out[:M].reshape(N, OH, OW, cout_pad)[..., :cout]
    feat_nchw = jnp.transpose(out_trim, (0, 3, 1, 2)).astype(jnp.float32)
    return out_trim, feat_nchw


def init_params(key, input_nc, ndf=64, n_layers=3):
    """Deterministic synthetic parameters matching NLayerDiscriminator.__init__."""
    cfgs = [(input_nc, ndf, 2, False, True)]              # conv0 + LeakyReLU
    nf = ndf
    for _ in range(1, n_layers):                          # conv1..conv(n-1)
        nf_prev, nf = nf, min(nf * 2, 512)
        cfgs.append((nf_prev, nf, 2, True, True))         # conv + BN + LeakyReLU
    nf_prev, nf = nf, min(nf * 2, 512)
    cfgs.append((nf_prev, nf, 1, True, True))             # stride-1 conv + BN + LReLU
    cfgs.append((nf, 1, 1, False, False))                 # final 1-channel conv
    params = []
    for (cin, cout, stride, use_bn, use_act) in cfgs:
        key, k1, k2 = jax.random.split(key, 3)
        w = 0.02 * jax.random.normal(k1, (cout, cin, KW, KW), jnp.float32)  # OIHW
        b = 0.02 * jax.random.normal(k2, (cout,), jnp.float32)
        gamma = jnp.ones((cout,), jnp.float32)             # BN default init
        beta = jnp.zeros((cout,), jnp.float32)
        params.append(dict(w=w, b=b, gamma=gamma, beta=beta,
                           stride=stride, use_bn=use_bn, use_act=use_act))
    return params


def nlayer_discriminator_forward(x_nchw, params):
    """Returns (final_output, [intermediate features]) == PyTorch (res[-1], res[1:])."""
    cur = jnp.transpose(x_nchw, (0, 2, 3, 1)).astype(jnp.bfloat16)   # NHWC, bf16 once
    feats = []
    for p in params:
        cur, feat = disc_layer(cur, p["w"], p["b"], p["gamma"], p["beta"],
                               stride=p["stride"], use_bn=p["use_bn"],
                               use_act=p["use_act"])
        feats.append(feat)
    return feats[-1], feats


# --------------------------------- main -------------------------------------
if __name__ == "__main__":
    key = jax.random.PRNGKey(0)
    k_x, k_p = jax.random.split(key)

    # Small shapes: batch=2, input_nc=4, 16x16 spatial, ndf=8, n_layers=3.
    x = jax.random.normal(k_x, (2, 4, 16, 16), jnp.float32)   # NCHW like PyTorch
    params = init_params(k_p, input_nc=4, ndf=8, n_layers=3)

    final_out, feats = nlayer_discriminator_forward(x, params)
    jax.block_until_ready(final_out)
    for f in feats:
        jax.block_until_ready(f)

    # Sanity: expected shape chain 16->9->5->3->4->5 (H=W), channels 8,16,32,64,1.
    expected = [(2, 8, 9, 9), (2, 16, 5, 5), (2, 32, 3, 3), (2, 64, 4, 4), (2, 1, 5, 5)]
    assert [tuple(f.shape) for f in feats] == expected
    assert tuple(final_out.shape) == expected[-1]
    assert all(bool(jnp.all(jnp.isfinite(f))) for f in feats)

    print("KERNEL_OK")
</pallas_src>

<mosaic_0001>
module attributes {stable_mosaic.version = 11 : i64} {
  func.func @_conv_act_kernel(%arg0: i32, %arg1: memref<176x64xbf16, #tpu.memory_space<vmem>>, %arg2: memref<64x128xbf16, #tpu.memory_space<vmem>>, %arg3: memref<1x128xf32, #tpu.memory_space<vmem>>, %arg4: memref<176x128xbf16, #tpu.memory_space<vmem>>) attributes {dimension_semantics = [#tpu.dimension_semantics<parallel>], iteration_bounds = array<i64: 1>, scalar_prefetch = 0 : i64, scratch_operands = 0 : i64, tpu.core_type = #tpu.core_type<tc>, window_params = [{transform_indices = @transform_0, window_bounds = array<i64: 176, 64>}, {pipeline_mode = #tpu.pipeline_mode<synchronous>, transform_indices = @transform_1, window_bounds = array<i64: 64, 128>}, {pipeline_mode = #tpu.pipeline_mode<synchronous>, transform_indices = @transform_2, window_bounds = array<i64: 1, 128>}, {transform_indices = @transform_3, window_bounds = array<i64: 176, 128>}]} {
    %c0 = arith.constant 0 : index
    %c0_0 = arith.constant 0 : index
    %0 = vector.load %arg1[%c0, %c0_0] : memref<176x64xbf16, #tpu.memory_space<vmem>>, vector<176x64xbf16>
    %c0_1 = arith.constant 0 : index
    %c0_2 = arith.constant 0 : index
    %1 = vector.load %arg2[%c0_1, %c0_2] : memref<64x128xbf16, #tpu.memory_space<vmem>>, vector<64x128xbf16>
    %cst = arith.constant dense<0.000000e+00> : vector<176x128xf32>
    %2 = tpu.matmul %0, %1, %cst {dimension_numbers = #tpu.dot_dimension_numbers<[1], [0], [0], [1], [0, 0, 1, 1], [], []>} : vector<176x64xbf16>, vector<64x128xbf16>, vector<176x128xf32> -> vector<176x128xf32>
    %c0_3 = arith.constant 0 : index
    %c0_4 = arith.constant 0 : index
    %3 = vector.load %arg3[%c0_3, %c0_4] : memref<1x128xf32, #tpu.memory_space<vmem>>, vector<1x128xf32>
    %4 = vector.broadcast %3 : vector<1x128xf32> to vector<176x128xf32>
    %5 = arith.addf %2, %4 : vector<176x128xf32>
    %cst_5 = arith.constant 0.000000e+00 : f32
    %6 = vector.broadcast %cst_5 : f32 to vector<176x128xf32>
    %7 = arith.cmpf ogt, %5, %6 : vector<176x128xf32>
    %cst_6 = arith.constant 2.000000e-01 : f32
    %8 = vector.broadcast %cst_6 : f32 to vector<176x128xf32>
    %9 = arith.mulf %8, %5 : vector<176x128xf32>
    %10 = arith.select %7, %5, %9 : vector<176x128xi1>, vector<176x128xf32>
    %11 = arith.truncf %10 : vector<176x128xf32> to vector<176x128xbf16>
    %c0_7 = arith.constant 0 : index
    %c0_8 = arith.constant 0 : index
    %12 = vector.load %arg4[%c0_7, %c0_8] : memref<176x128xbf16, #tpu.memory_space<vmem>>, vector<176x128xbf16>
    tpu.vector_store %arg4[%c0_7, %c0_8], %11 {strides = array<i32>} : memref<176x128xbf16, #tpu.memory_space<vmem>>, vector<176x128xbf16>,
    return
  }
  func.func @transform_0(%arg0: i32) -> (i32, i32) {
    %c0_i32 = arith.constant 0 : i32
    %c0_i32_0 = arith.constant 0 : i32
    return %arg0, %c0_i32 : i32, i32
  }
  func.func @transform_1(%arg0: i32) -> (i32, i32) {
    %c0_i32 = arith.constant 0 : i32
    %c0_i32_0 = arith.constant 0 : i32
    %c0_i32_1 = arith.constant 0 : i32
    return %c0_i32, %c0_i32_0 : i32, i32
  }
  func.func @transform_2(%arg0: i32) -> (i32, i32) {
    %c0_i32 = arith.constant 0 : i32
    %c0_i32_0 = arith.constant 0 : i32
    %c0_i32_1 = arith.constant 0 : i32
    return %c0_i32, %c0_i32_0 : i32, i32
  }
  func.func @transform_3(%arg0: i32) -> (i32, i32) {
    %c0_i32 = arith.constant 0 : i32
    %c0_i32_0 = arith.constant 0 : i32
    return %arg0, %c0_i32 : i32, i32
  }
}

</mosaic_0001>

<llo_original>
// kernel: tpu_custom_call.1
$region0: #{tpu_custom_call.1}
  #allocation0 [shape = 'u32[]', space=smem, size = 0x4, offset = 0x4, fixed_abs, tag = 'smem constant byte address 0x4 - core index']
  #allocation1 [shape = 'u32[144,128]{1,0:T(1,128)}', space=vmem, size = 0x12000, scoped, tag = 'internal scratch']
  %s0 = inlined_call_operand.vmem [shape: bf16[176,64], index: 0, kind: input, shape index: {}]
  %s1 = inlined_call_operand.vmem [shape: bf16[64,128], index: 1, kind: input, shape index: {}]
  %s2 = inlined_call_operand.vmem [shape: f32[1,128], index: 2, kind: input, shape index: {}]
  %s3 = inlined_call_operand.hbm [shape: bf16[176,128], index: 3, kind: output, shape index: {}]
  %s4 = sld [smem:[#allocation0]]
  $region22: #{tpu_custom_call.1} parent=0
    _
  %s6 = ssub.s32 1, %s4
  %s7 = scalar_select 0, %s6, %s4
  $region1: #{tpu_custom_call.1} parent=0
    #allocation2 [shape = 'u8[45056]{0}', space=vmem, size = 0xb000, scoped, tag = 'output window, operand 0, single buffered']
    #allocation3 [shape = 's32[1]{0}', space=sflag, size = 0x4, scoped, tag = 'scoped memory for tpu_custom_call.1']
    %8 = vsyncpa [#allocation3], 0
    // Predicated region
    $region2: #{tpu_custom_call.1} parent=1 // pred_check
      _
    $region3: #{tpu_custom_call.1} parent=1 // pred_check_branch
      %10 = sbr.rel (0) target = $region5
    $region4: #{tpu_custom_call.1} parent=1 // pred_region
      _
    $region5: #{tpu_custom_call.1} parent=1 // pred_fallthru
      _
    // Predicated region
    $region6: #{tpu_custom_call.1} parent=1 // pred_check
      _
    $region7: #{tpu_custom_call.1} parent=1 // pred_check_branch
      %12 = sbr.rel (0) target = $region9
    $region8: #{tpu_custom_call.1} parent=1 // pred_region
      _
    $region9: #{tpu_custom_call.1} parent=1 // pred_fallthru
      _
    // Predicated region
    $region10: #{tpu_custom_call.1} parent=1 // pred_check
      _
    $region11: #{tpu_custom_call.1} parent=1 // pred_check_branch
      %14 = sbr.rel (0) target = $region13
    $region12: #{tpu_custom_call.1} parent=1 // pred_region
      _
    $region13: #{tpu_custom_call.1} parent=1 // pred_fallthru
      _
    %v16 = vld [vmem:[%s0] sm:$0xf]
    %v17 = vld [vmem:[%s0 + $0x4] sm:$0xf]
    %v18 = vld [vmem:[%s0 + $0x8] sm:$0xf]
    %v19 = vld [vmem:[%s0 + $0xc] sm:$0xf]
    %v20 = vld [vmem:[%s0 + $0x10] sm:$0xf]
    %v21 = vld [vmem:[%s0 + $0x14] sm:$0xf]
    %v22 = vld [vmem:[%s0 + $0x18] sm:$0xf]
    %v23 = vld [vmem:[%s0 + $0x1c] sm:$0xf]
    %v24 = vld [vmem:[%s0 + $0x20] sm:$0xf]
    %v25 = vld [vmem:[%s0 + $0x24] sm:$0xf]
    %v26 = vld [vmem:[%s0 + $0x28] sm:$0xf]
    %v27 = vld [vmem:[%s0 + $0x2c] sm:$0xf]
    %v28 = vld [vmem:[%s0 + $0x30] sm:$0xf]
    %v29 = vld [vmem:[%s0 + $0x34] sm:$0xf]
    %v30 = vld [vmem:[%s0 + $0x38] sm:$0xf]
    %v31 = vld [vmem:[%s0 + $0x3c] sm:$0xf]
    %v32 = vld [vmem:[%s0 + $0x40] sm:$0xf]
    %v33 = vld [vmem:[%s0 + $0x44] sm:$0xf]
    %v34 = vld [vmem:[%s0 + $0x48] sm:$0xf]
    %v35 = vld [vmem:[%s0 + $0x4c] sm:$0xf]
    %v36 = vld [vmem:[%s0 + $0x50] sm:$0xf]
    %v37 = vld [vmem:[%s0 + $0x54] sm:$0xf]
    %v38 = vld [vmem:[%s1] sm:$0xf]
    %v39 = vld [vmem:[%s1 + $0x4] sm:$0xf]
    %v40 = vld [vmem:[%s1 + $0x8] sm:$0xf]
    %v41 = vld [vmem:[%s1 + $0xc] sm:$0xf]
    %v42 = vld [vmem:[%s1 + $0x10] sm:$0xf]
    %v43 = vld [vmem:[%s1 + $0x14] sm:$0xf]
    %v44 = vld [vmem:[%s1 + $0x18] sm:$0xf]
    %v45 = vld [vmem:[%s1 + $0x1c] sm:$0xf]
    %v46 = vld [vmem:[%s2] sm:$0x1]
    %v48 = vlaneseq
    %v49 = vshrl.u32 %v48, 7
    %v50 = vsub.s32 0, %v49
    %v51 = vrot.slane %v46, %v50
    %v75 = vunpack.c.l.b16 %v16
    %v76 = vunpack.c.l.b16 %v17
    %v77 = vunpack.c.l.b16 %v18
    %v78 = vunpack.c.l.b16 %v19
    %v79 = vunpack.c.l.b16 %v20
    %v80 = vunpack.c.l.b16 %v21
    %v81 = vunpack.c.l.b16 %v22
    %v82 = vunpack.c.l.b16 %v23
    %v83 = vunpack.c.l.b16 %v24
    %v84 = vunpack.c.l.b16 %v25
    %v85 = vunpack.c.l.b16 %v26
    %v86 = vunpack.c.l.b16 %v27
    %v87 = vunpack.c.l.b16 %v28
    %v88 = vunpack.c.l.b16 %v29
    %v89 = vunpack.c.l.b16 %v30
    %v90 = vunpack.c.l.b16 %v31
    %v91 = vunpack.c.l.b16 %v32
    %v92 = vunpack.c.l.b16 %v33
    %v93 = vunpack.c.l.b16 %v34
    %v94 = vunpack.c.l.b16 %v35
    %v95 = vunpack.c.l.b16 %v36
    %v96 = vunpack.c.l.b16 %v37
    %v97 = vpack.c.b16 %v76, %v75
    %v98 = vpack.c.b16 %v78, %v77
    %v99 = vpack.c.b16 %v80, %v79
    %v100 = vpack.c.b16 %v82, %v81
    %v101 = vpack.c.b16 %v84, %v83
    %v102 = vpack.c.b16 %v86, %v85
    %v103 = vpack.c.b16 %v88, %v87
    %v104 = vpack.c.b16 %v90, %v89
    %v105 = vpack.c.b16 %v92, %v91
    %v106 = vpack.c.b16 %v94, %v93
    %v107 = vpack.c.b16 %v96, %v95
    %v116 = vunpack.c.l.b16 %v38
    %v117 = vunpack.c.l.b16 %v39
    %v118 = vunpack.c.l.b16 %v40
    %v119 = vunpack.c.l.b16 %v41
    %v120 = vunpack.c.l.b16 %v42
    %v121 = vunpack.c.l.b16 %v43
    %v122 = vunpack.c.l.b16 %v44
    %v123 = vunpack.c.l.b16 %v45
    %v124 = vpack.c.b16 %v117, %v116
    %v125 = vpack.c.b16 %v119, %v118
    %v126 = vpack.c.b16 %v121, %v120
    %v127 = vpack.c.b16 %v123, %v122
    %vm132 = vcmask 523264
    %v134 = vsel %vm132, %v97, 0
    %v137 = vsel %vm132, %v98, 0
    %v140 = vsel %vm132, %v99, 0
    %v143 = vsel %vm132, %v100, 0
    %v146 = vsel %vm132, %v101, 0
    %v149 = vsel %vm132, %v102, 0
    %v152 = vsel %vm132, %v103, 0
    %v155 = vsel %vm132, %v104, 0
    %v158 = vsel %vm132, %v105, 0
    %v161 = vsel %vm132, %v106, 0
    %v164 = vsel %vm132, %v107, 0
    %166 = vmatprep.subr.bf16.mxu0 0
    %167 = vmatpush1.bf16.msra.mxu0 %v124
    %168 = vmatprep.subr.bf16.mxu0 0
    %169 = vmatpush1.bf16.msra.mxu0 %v125
    %170 = vmatprep.subr.bf16.mxu0 0
    %171 = vmatpush1.bf16.msra.mxu0 %v126
    %172 = vmatprep.subr.bf16.mxu0 0
    %173 = vmatpush1.bf16.msra.mxu0 %v127
    %174 = vmatprep.subr.bf16.mxu0 0
    %175 = vmatpush1.bf16.msra.mxu0 0
    %176 = vmatprep.subr.bf16.mxu0 0
    %177 = vmatpush1.bf16.msra.mxu0 0
    %178 = vmatprep.subr.bf16.mxu0 0
    %179 = vmatpush1.bf16.msra.mxu0 0
    %180 = vmatprep.subr.bf16.mxu0 0
    %181 = vmatpush1.bf16.msra.mxu0 0
    %182 = vmatprep.subr.bf16.mxu0 0
    %183 = vmatpush1.bf16.msra.mxu0 0
    %184 = vmatprep.subr.bf16.mxu0 0
    %185 = vmatpush1.bf16.msra.mxu0 0
    %186 = vmatprep.subr.bf16.mxu0 0
    %187 = vmatpush1.bf16.msra.mxu0 0
    %188 = vmatprep.subr.bf16.mxu0 0
    %189 = vmatpush1.bf16.msra.mxu0 0
    %190 = vmatprep.subr.bf16.mxu0 0
    %191 = vmatpush1.bf16.msra.mxu0 0
    %192 = vmatprep.subr.bf16.mxu0 0
    %193 = vmatpush1.bf16.msra.mxu0 0
    %194 = vmatprep.subr.bf16.mxu0 0
    %195 = vmatpush1.bf16.msra.mxu0 0
    %196 = vmatprep.subr.bf16.mxu0 0
    %197 = vmatpush1.bf16.msra.mxu0 0
    %198 = vmatprep.mubr.bf16.mxu0 0
    %199 = vmatmul.mubr.bf16.gmra.mrb[0].mxu0 %v134
    %v200 = vpop.f32.mrb[0].mxu0
    %v201 = vadd.f32 %v51, %v200
    %v202 = vpop.f32.mrb[0].mxu0
    %v203 = vpop.f32.mrb[0].mxu0
    %v204 = vadd.f32 %v51, %v203
    %v205 = vpop.f32.mrb[0].mxu0
    %206 = vmatprep.mubr.bf16.mxu0 0
    %207 = vmatmul.mubr.bf16.gmra.mrb[0].mxu0 %v137
    %v208 = vpop.f32.mrb[0].mxu0
    %v209 = vadd.f32 %v51, %v208
    %v210 = vpop.f32.mrb[0].mxu0
    %v211 = vpop.f32.mrb[0].mxu0
    %v212 = vadd.f32 %v51, %v211
    %v213 = vpop.f32.mrb[0].mxu0
    %214 = vmatprep.mubr.bf16.mxu0 0
    %215 = vmatmul.mubr.bf16.gmra.mrb[0].mxu0 %v140
    %v216 = vpop.f32.mrb[0].mxu0
    %v217 = vadd.f32 %v51, %v216
    %v218 = vpop.f32.mrb[0].mxu0
    %v219 = vpop.f32.mrb[0].mxu0
    %v220 = vadd.f32 %v51, %v219
    %v221 = vpop.f32.mrb[0].mxu0
    %222 = vmatprep.mubr.bf16.mxu0 0
    %223 = vmatmul.mubr.bf16.gmra.mrb[0].mxu0 %v143
    %v224 = vpop.f32.mrb[0].mxu0
    %v225 = vadd.f32 %v51, %v224
    %v226 = vpop.f32.mrb[0].mxu0
    %v227 = vpop.f32.mrb[0].mxu0
    %v228 = vadd.f32 %v51, %v227
    %v229 = vpop.f32.mrb[0].mxu0
    %230 = vmatprep.mubr.bf16.mxu0 0
    %231 = vmatmul.mubr.bf16.gmra.mrb[0].mxu0 %v146
    %v232 = vpop.f32.mrb[0].mxu0
    %v233 = vadd.f32 %v51, %v232
    %v234 = vpop.f32.mrb[0].mxu0
    %v235 = vpop.f32.mrb[0].mxu0
    %v236 = vadd.f32 %v51, %v235
    %v237 = vpop.f32.mrb[0].mxu0
    %238 = vmatprep.mubr.bf16.mxu0 0
    %239 = vmatmul.mubr.bf16.gmra.mrb[0].mxu0 %v149
    %v240 = vpop.f32.mrb[0].mxu0
    %v241 = vadd.f32 %v51, %v240
    %v242 = vpop.f32.mrb[0].mxu0
    %v243 = vpop.f32.mrb[0].mxu0
    %v244 = vadd.f32 %v51, %v243
    %v245 = vpop.f32.mrb[0].mxu0
    %246 = vmatprep.mubr.bf16.mxu0 0
    %247 = vmatmul.mubr.bf16.gmra.mrb[0].mxu0 %v152
    %v248 = vpop.f32.mrb[0].mxu0
    %v249 = vadd.f32 %v51, %v248
    %v250 = vpop.f32.mrb[0].mxu0
    %v251 = vpop.f32.mrb[0].mxu0
    %v252 = vadd.f32 %v51, %v251
    %v253 = vpop.f32.mrb[0].mxu0
    %254 = vmatprep.mubr.bf16.mxu0 0
    %255 = vmatmul.mubr.bf16.gmra.mrb[0].mxu0 %v155
    %v256 = vpop.f32.mrb[0].mxu0
    %v257 = vadd.f32 %v51, %v256
    %v258 = vpop.f32.mrb[0].mxu0
    %v259 = vpop.f32.mrb[0].mxu0
    %v260 = vadd.f32 %v51, %v259
    %v261 = vpop.f32.mrb[0].mxu0
    %262 = vmatprep.mubr.bf16.mxu0 0
    %263 = vmatmul.mubr.bf16.gmra.mrb[0].mxu0 %v158
    %v264 = vpop.f32.mrb[0].mxu0
    %v265 = vadd.f32 %v51, %v264
    %v266 = vpop.f32.mrb[0].mxu0
    %v267 = vpop.f32.mrb[0].mxu0
    %v268 = vadd.f32 %v51, %v267
    %v269 = vpop.f32.mrb[0].mxu0
    %270 = vmatprep.mubr.bf16.mxu0 0
    %271 = vmatmul.mubr.bf16.gmra.mrb[0].mxu0 %v161
    %v272 = vpop.f32.mrb[0].mxu0
    %v273 = vadd.f32 %v51, %v272
    %v274 = vpop.f32.mrb[0].mxu0
    %v275 = vpop.f32.mrb[0].mxu0
    %v276 = vadd.f32 %v51, %v275
    %v277 = vpop.f32.mrb[0].mxu0
    %278 = vmatprep.mubr.bf16.mxu0 0
    %279 = vmatmul.mubr.bf16.gmra.mrb[0].mxu0 %v164
    %v280 = vpop.f32.mrb[0].mxu0
    %v281 = vadd.f32 %v51, %v280
    %v282 = vpop.f32.mrb[0].mxu0
    %v283 = vpop.f32.mrb[0].mxu0
    %v284 = vadd.f32 %v51, %v283
    %v285 = vpop.f32.mrb[0].mxu0
    %286 = vdwg.mxu0
    %vm287 = vcmp.gt.f32.partialorder %v201, 0.0
    %vm288 = vcmp.gt.f32.partialorder %v204, 0.0
    %vm289 = vcmp.gt.f32.partialorder %v209, 0.0
    %vm290 = vcmp.gt.f32.partialorder %v212, 0.0
    %vm291 = vcmp.gt.f32.partialorder %v217, 0.0
    %vm292 = vcmp.gt.f32.partialorder %v220, 0.0
    %vm293 = vcmp.gt.f32.partialorder %v225, 0.0
    %vm294 = vcmp.gt.f32.partialorder %v228, 0.0
    %vm295 = vcmp.gt.f32.partialorder %v233, 0.0
    %vm296 = vcmp.gt.f32.partialorder %v236, 0.0
    %vm297 = vcmp.gt.f32.partialorder %v241, 0.0
    %vm298 = vcmp.gt.f32.partialorder %v244, 0.0
    %vm299 = vcmp.gt.f32.partialorder %v249, 0.0
    %vm300 = vcmp.gt.f32.partialorder %v252, 0.0
    %vm301 = vcmp.gt.f32.partialorder %v257, 0.0
    %vm302 = vcmp.gt.f32.partialorder %v260, 0.0
    %vm303 = vcmp.gt.f32.partialorder %v265, 0.0
    %vm304 = vcmp.gt.f32.partialorder %v268, 0.0
    %vm305 = vcmp.gt.f32.partialorder %v273, 0.0
    %vm306 = vcmp.gt.f32.partialorder %v276, 0.0
    %vm307 = vcmp.gt.f32.partialorder %v281, 0.0
    %vm308 = vcmp.gt.f32.partialorder %v284, 0.0
    %v309 = vmul.f32 %v201, 0.2
    %v310 = vmul.f32 %v204, 0.2
    %v311 = vmul.f32 %v209, 0.2
    %v312 = vmul.f32 %v212, 0.2
    %v313 = vmul.f32 %v217, 0.2
    %v314 = vmul.f32 %v220, 0.2
    %v315 = vmul.f32 %v225, 0.2
    %v316 = vmul.f32 %v228, 0.2
    %v317 = vmul.f32 %v233, 0.2
    %v318 = vmul.f32 %v236, 0.2
    %v319 = vmul.f32 %v241, 0.2
    %v320 = vmul.f32 %v244, 0.2
    %v321 = vmul.f32 %v249, 0.2
    %v322 = vmul.f32 %v252, 0.2
    %v323 = vmul.f32 %v257, 0.2
    %v324 = vmul.f32 %v260, 0.2
    %v325 = vmul.f32 %v265, 0.2
    %v326 = vmul.f32 %v268, 0.2
    %v327 = vmul.f32 %v273, 0.2
    %v328 = vmul.f32 %v276, 0.2
    %v329 = vmul.f32 %v281, 0.2
    %v330 = vmul.f32 %v284, 0.2
    %v331 = vsel %vm287, %v201, %v309
    %v332 = vsel %vm288, %v204, %v310
    %v333 = vsel %vm289, %v209, %v311
    %v334 = vsel %vm290, %v212, %v312
    %v335 = vsel %vm291, %v217, %v313
    %v336 = vsel %vm292, %v220, %v314
    %v337 = vsel %vm293, %v225, %v315
    %v338 = vsel %vm294, %v228, %v316
    %v339 = vsel %vm295, %v233, %v317
    %v340 = vsel %vm296, %v236, %v318
    %v341 = vsel %vm297, %v241, %v319
    %v342 = vsel %vm298, %v244, %v320
    %v343 = vsel %vm299, %v249, %v321
    %v344 = vsel %vm300, %v252, %v322
    %v345 = vsel %vm301, %v257, %v323
    %v346 = vsel %vm302, %v260, %v324
    %v347 = vsel %vm303, %v265, %v325
    %v348 = vsel %vm304, %v268, %v326
    %v349 = vsel %vm305, %v273, %v327
    %v350 = vsel %vm306, %v276, %v328
    %v351 = vsel %vm307, %v281, %v329
    %v352 = vsel %vm308, %v284, %v330
    %v353 = vpack.c.bf16 %v332, %v331
    %v354 = vpack.c.bf16 %v334, %v333
    %v355 = vpack.c.bf16 %v336, %v335
    %v356 = vpack.c.bf16 %v338, %v337
    %v357 = vpack.c.bf16 %v340, %v339
    %v358 = vpack.c.bf16 %v342, %v341
    %v359 = vpack.c.bf16 %v344, %v343
    %v360 = vpack.c.bf16 %v346, %v345
    %v361 = vpack.c.bf16 %v348, %v347
    %v362 = vpack.c.bf16 %v350, %v349
    %v363 = vpack.c.bf16 %v352, %v351
    %v375 = vunpack.c.l.b16 %v353
    %v376 = vunpack.c.h.b16 %v353
    %v377 = vunpack.c.l.b16 %v354
    %v378 = vunpack.c.h.b16 %v354
    %v379 = vunpack.c.l.b16 %v355
    %v380 = vunpack.c.h.b16 %v355
    %v381 = vunpack.c.l.b16 %v356
    %v382 = vunpack.c.h.b16 %v356
    %v383 = vunpack.c.l.b16 %v357
    %v384 = vunpack.c.h.b16 %v357
    %v385 = vunpack.c.l.b16 %v358
    %v386 = vunpack.c.h.b16 %v358
    %v387 = vunpack.c.l.b16 %v359
    %v388 = vunpack.c.h.b16 %v359
    %v389 = vunpack.c.l.b16 %v360
    %v390 = vunpack.c.h.b16 %v360
    %v391 = vunpack.c.l.b16 %v361
    %v392 = vunpack.c.h.b16 %v361
    %v393 = vunpack.c.l.b16 %v362
    %v394 = vunpack.c.h.b16 %v362
    %v395 = vunpack.c.l.b16 %v363
    %v396 = vunpack.c.h.b16 %v363
    %v397 = vpack.c.b16 %v375, %v375
    %v398 = vpack.c.b16 %v376, %v376
    %v399 = vpack.c.b16 %v377, %v377
    %v400 = vpack.c.b16 %v378, %v378
    %v401 = vpack.c.b16 %v379, %v379
    %v402 = vpack.c.b16 %v380, %v380
    %v403 = vpack.c.b16 %v381, %v381
    %v404 = vpack.c.b16 %v382, %v382
    %v405 = vpack.c.b16 %v383, %v383
    %v406 = vpack.c.b16 %v384, %v384
    %v407 = vpack.c.b16 %v385, %v385
    %v408 = vpack.c.b16 %v386, %v386
    %v409 = vpack.c.b16 %v387, %v387
    %v410 = vpack.c.b16 %v388, %v388
    %v411 = vpack.c.b16 %v389, %v389
    %v412 = vpack.c.b16 %v390, %v390
    %v413 = vpack.c.b16 %v391, %v391
    %v414 = vpack.c.b16 %v392, %v392
    %v415 = vpack.c.b16 %v393, %v393
    %v416 = vpack.c.b16 %v394, %v394
    %v417 = vpack.c.b16 %v395, %v395
    %v418 = vpack.c.b16 %v396, %v396
    %441 = vst [vmem:[#allocation2] sm:$0xf] %v397
    %442 = vst [vmem:[#allocation2 + $0x4] sm:$0xf] %v398
    %443 = vst [vmem:[#allocation2 + $0x8] sm:$0xf] %v399
    %444 = vst [vmem:[#allocation2 + $0xc] sm:$0xf] %v400
    %445 = vst [vmem:[#allocation2 + $0x10] sm:$0xf] %v401
    %446 = vst [vmem:[#allocation2 + $0x14] sm:$0xf] %v402
    %447 = vst [vmem:[#allocation2 + $0x18] sm:$0xf] %v403
    %448 = vst [vmem:[#allocation2 + $0x1c] sm:$0xf] %v404
    %449 = vst [vmem:[#allocation2 + $0x20] sm:$0xf] %v405
    %450 = vst [vmem:[#allocation2 + $0x24] sm:$0xf] %v406
    %451 = vst [vmem:[#allocation2 + $0x28] sm:$0xf] %v407
    %452 = vst [vmem:[#allocation2 + $0x2c] sm:$0xf] %v408
    %453 = vst [vmem:[#allocation2 + $0x30] sm:$0xf] %v409
    %454 = vst [vmem:[#allocation2 + $0x34] sm:$0xf] %v410
    %455 = vst [vmem:[#allocation2 + $0x38] sm:$0xf] %v411
    %456 = vst [vmem:[#allocation2 + $0x3c] sm:$0xf] %v412
    %457 = vst [vmem:[#allocation2 + $0x40] sm:$0xf] %v413
    %458 = vst [vmem:[#allocation2 + $0x44] sm:$0xf] %v414
    %459 = vst [vmem:[#allocation2 + $0x48] sm:$0xf] %v415
    %460 = vst [vmem:[#allocation2 + $0x4c] sm:$0xf] %v416
    %461 = vst [vmem:[#allocation2 + $0x50] sm:$0xf] %v417
    %462 = vst [vmem:[#allocation2 + $0x54] sm:$0xf] %v418
    // Predicated region
    $region14: #{tpu_custom_call.1} parent=1 // pred_check
      _
    $region15: #{tpu_custom_call.1} parent=1 // pred_check_branch
      %464 = sbr.rel (0) target = $region17
    $region16: #{tpu_custom_call.1} parent=1 // pred_region
      %s466 = ssub.s32 1408, 1408
      %467 = vsyncadd [#allocation3], %s466
      %s468 = sshll.u32 [#allocation2], 4
      %s469 = int_to_ptr.vmem [resolvable:$true] %s468
      %474 = dma.vmem_to_hbm [thread:$0]  %s469, 1408, %s3, [#allocation3], 64, 64, 4
    $region17: #{tpu_custom_call.1} parent=1 // pred_fallthru
      _
    // Predicated region
    $region18: #{tpu_custom_call.1} parent=1 // pred_check
      _
    $region19: #{tpu_custom_call.1} parent=1 // pred_check_branch
      %476 = sbr.rel (0) target = $region21
    $region20: #{tpu_custom_call.1} parent=1 // pred_region
      %477 = dma.done [#allocation3], 1408
    $region21: #{tpu_custom_call.1} parent=1 // pred_fallthru
      _
    %478 = vsyncpa [#allocation3], 1

</llo_original>
